<compile_context>
chip_gen: v6e
topology: v6e:2x2x1
jax: 0.10.0
libtpu: 0.0.40
codegen_flags: <defaults>
</compile_context>

<pallas_src>
import functools

import jax
import jax.numpy as jnp
from jax import lax
from jax.experimental import pallas as pl
from jax.experimental.pallas import tpu as pltpu


def _round_up(x, m):
    return ((x + m - 1) // m) * m


def _conv_kernel(w_ref, b_ref, x_hbm, o_ref, slab_ref, patch_ref, sem_ref, *,
                 tm, slab_len, cin_p, kh, kw, dilation, wp, negative_slope):
    """One grid step: DMA a halo'd slab, build (Kc, TM) patches, one MXU dot."""
    b = pl.program_id(0)
    j = pl.program_id(1)
    n_tiles = pl.num_programs(1)

    def copy_in(tile_idx, slot):
        start = pl.multiple_of(tile_idx * tm, 128)
        return pltpu.make_async_copy(
            x_hbm.at[b, :, pl.ds(start, slab_len)],   # (Cin_p, slab_len) HBM slab
            slab_ref.at[slot],
            sem_ref.at[slot])

    # Prime the first slab for this image (tile axis is "arbitrary", starts at 0).
    @pl.when(j == 0)
    def _():
        copy_in(0, 0).start()

    slot = j % 2
    copy_in(j, slot).wait()

    # Prefetch the next tile into the other buffer (double buffering).
    @pl.when(j + 1 < n_tiles)
    def _():
        copy_in(j + 1, 1 - slot).start()

    # In-kernel im2col: rows of the flattened padded image mean each tap is a
    # pure contiguous shift of the slab -> (Kc_p, TM) patch matrix in VMEM.
    slab = slab_ref[slot]                              # (Cin_p, slab_len)
    for ih in range(kh):
        for iw in range(kw):
            t = ih * kw + iw
            off = ih * dilation * wp + iw * dilation   # static offset
            patch_ref[t * cin_p:(t + 1) * cin_p, :] = slab[:, off:off + tm]

    # Single lane-dense MXU matmul, fused bias + LeakyReLU (f32 epilogue).
    y = jnp.dot(w_ref[...], patch_ref[...], preferred_element_type=jnp.float32)
    y = y + b_ref[...].astype(jnp.float32)
    y = jnp.where(y >= 0, y, negative_slope * y)
    o_ref[0] = y.astype(o_ref.dtype)


def basic_dilated_conv(x, weight, bias, *, stride, padding, dilation,
                       negative_slope=0.01, compute_dtype=None,
                       vmem_budget_bytes=16 * 1024 * 1024):
    """Forward of BasicDilatedConv.

    x:      (N, Cin, H, W)        NCHW (PyTorch layout)
    weight: (Cout, Cin, Kh, Kw)   OIHW
    bias:   (Cout,) or None
    Returns (N, Cout, Ho, Wo)     NCHW
    compute_dtype: optionally jnp.bfloat16 to halve operand HBM traffic
                   (f32 accumulation is kept either way).
    """
    n, cin, h, w = x.shape
    cout, cin_w, kh, kw = weight.shape
    assert cin == cin_w

    out_dtype = x.dtype
    cdt = jnp.dtype(compute_dtype) if compute_dtype is not None else jnp.dtype(x.dtype)
    isz = jnp.dtype(cdt).itemsize
    osz = jnp.dtype(out_dtype).itemsize

    ho = (h + 2 * padding - dilation * (kh - 1) - 1) // stride + 1
    wo = (w + 2 * padding - dilation * (kw - 1) - 1) // stride + 1

    hp = h + 2 * padding
    wp = w + 2 * padding
    ho1 = hp - dilation * (kh - 1)           # stride-1 "full" output height
    wo1 = wp - dilation * (kw - 1)           # stride-1 "full" output width

    # Pad channels to a sublane multiple so in-kernel patch stores are aligned.
    cin_p = _round_up(cin, 8)
    kc_p = kh * kw * cin_p

    # ---- layout glue: O(input) bytes, no Kh*Kw blow-up ----------------------
    x_pad = jnp.pad(x.astype(cdt),
                    ((0, 0), (0, cin_p - cin),
                     (padding, padding), (padding, padding)))
    x_flat = x_pad.reshape(n, cin_p, hp * wp)          # row-flattened padded image

    # Extended output: Ho1 rows of Wp columns (last (kw-1)*d cols are garbage,
    # sliced off below) -> every conv tap is a contiguous shift of x_flat.
    m_ext = ho1 * wp

    # ---- VMEM-aware, lane-dense spatial tile --------------------------------
    halo = (kh - 1) * dilation * wp + (kw - 1) * dilation
    halo_p = _round_up(max(halo, 0), 128)
    # per-step VMEM: 2x slab (double-buffered) + patch + 2x out block + f32 y,
    # plus (double-buffered) weight & bias and the slab halo.
    fixed = 2 * (cout * kc_p + cout) * isz + 2 * cin_p * halo_p * isz
    per_tm = (2 * cin_p + kc_p) * isz + 2 * cout * osz + cout * 4
    tm_cap = max((vmem_budget_bytes - fixed) // per_tm, 128)
    tm = min(_round_up(m_ext, 128), (tm_cap // 128) * 128, 8192)
    tm = max(tm, 128)

    m_pad = _round_up(m_ext, tm)
    n_tiles = m_pad // tm
    slab_len = tm + halo_p

    # Pad the flat image so every slab DMA [j*tm, j*tm + slab_len) is in bounds.
    l_need = (n_tiles - 1) * tm + slab_len
    x_flat = jnp.pad(x_flat, ((0, 0), (0, 0), (0, l_need - hp * wp)))

    # Weight -> (Cout, Kc_p), contraction order (kh, kw, cin_p); bias (Cout, 1).
    w_p = jnp.pad(weight, ((0, 0), (0, cin_p - cin), (0, 0), (0, 0)))
    w2d = jnp.transpose(w_p, (0, 2, 3, 1)).reshape(cout, kc_p).astype(cdt)
    if bias is None:
        bias2d = jnp.zeros((cout, 1), jnp.float32)
    else:
        bias2d = bias.reshape(cout, 1).astype(jnp.float32)

    kernel = functools.partial(
        _conv_kernel, tm=tm, slab_len=slab_len, cin_p=cin_p, kh=kh, kw=kw,
        dilation=dilation, wp=wp, negative_slope=negative_slope)

    cost = pl.CostEstimate(
        flops=2 * n * cout * kc_p * m_pad,
        transcendentals=0,
        bytes_accessed=(x_flat.size + w2d.size) * isz + n * cout * m_pad * osz)

    out_flat = pl.pallas_call(
        kernel,
        out_shape=jax.ShapeDtypeStruct((n, cout, m_pad), out_dtype),
        grid_spec=pltpu.PrefetchScalarGridSpec(
            num_scalar_prefetch=0,
            grid=(n, n_tiles),
            in_specs=[
                pl.BlockSpec((cout, kc_p), lambda b, j: (0, 0)),   # weight (resident)
                pl.BlockSpec((cout, 1), lambda b, j: (0, 0)),      # bias
                pl.BlockSpec(memory_space=pl.ANY),                 # padded input, HBM
            ],
            out_specs=pl.BlockSpec((1, cout, tm), lambda b, j: (b, 0, j)),
            scratch_shapes=[
                pltpu.VMEM((2, cin_p, slab_len), cdt),   # double-buffered input slab
                pltpu.VMEM((kc_p, tm), cdt),             # im2col patch matrix
                pltpu.SemaphoreType.DMA((2,)),
            ],
        ),
        compiler_params=pltpu.CompilerParams(
            dimension_semantics=("parallel", "arbitrary"),
            vmem_limit_bytes=32 * 1024 * 1024),
        cost_estimate=cost,
    )(w2d, bias2d, x_flat)

    # Lane-dense flat output -> drop pad/garbage columns (free slicing/reshape),
    # then stride-subsample if needed.
    full = out_flat[:, :, :m_ext].reshape(n, cout, ho1, wp)[:, :, :, :wo1]
    if stride > 1:
        full = full[:, :, ::stride, ::stride]
    return full[:, :, :ho, :wo]


def _reference(x, weight, bias, *, stride, padding, dilation, slope=0.01):
    ref = lax.conv_general_dilated(
        x, weight,
        window_strides=(stride, stride),
        padding=((padding, padding), (padding, padding)),
        rhs_dilation=(dilation, dilation),
        dimension_numbers=("NCHW", "OIHW", "NCHW"))
    if bias is not None:
        ref = ref + bias.reshape(1, -1, 1, 1)
    return jnp.where(ref >= 0, ref, slope * ref)


if __name__ == "__main__":
    # Deterministic synthetic params / inputs (no checkpoint loading).
    key = jax.random.PRNGKey(0)
    k_x, k_w, k_b = jax.random.split(key, 3)

    # BasicDilatedConv(in_channel=4, out_channel=8, kernel_size=3,
    #                  stride=1, padding=2, dilaton=2, bias=True)
    N, CIN, H, W = 2, 4, 16, 16
    COUT, K = 8, 3
    STRIDE, PADDING, DILATION = 1, 2, 2

    x = jax.random.normal(k_x, (N, CIN, H, W), dtype=jnp.float32)
    weight = jax.random.normal(k_w, (COUT, CIN, K, K), dtype=jnp.float32) * 0.1
    bias = jax.random.normal(k_b, (COUT,), dtype=jnp.float32) * 0.1

    out = basic_dilated_conv(x, weight, bias,
                             stride=STRIDE, padding=PADDING, dilation=DILATION)
    out = jax.block_until_ready(out)
    ref = _reference(x, weight, bias,
                     stride=STRIDE, padding=PADDING, dilation=DILATION)
    assert out.shape == ref.shape == (N, COUT, H, W)
    assert jnp.max(jnp.abs(out - ref)) < 1e-4

    # Secondary check: stride=2, dilation=1, bias=None path.
    out2 = basic_dilated_conv(x, weight, None,
                              stride=2, padding=1, dilation=1)
    out2 = jax.block_until_ready(out2)
    ref2 = _reference(x, weight, None, stride=2, padding=1, dilation=1)
    assert out2.shape == ref2.shape
    assert jnp.max(jnp.abs(out2 - ref2)) < 1e-4

    print("KERNEL_OK")
</pallas_src>

<mosaic_0001>
module attributes {stable_mosaic.version = 11 : i64} {
  func.func @_conv_kernel(%arg0: i32, %arg1: i32, %arg2: memref<8x72xf32, #tpu.memory_space<vmem>>, %arg3: memref<8x1xf32, #tpu.memory_space<vmem>>, %arg4: memref<2x8x512xf32, #tpu.memory_space<any>>, %arg5: memref<1x8x384xf32, #tpu.memory_space<vmem>>, %arg6: memref<2x8x512xf32, #tpu.memory_space<vmem>>, %arg7: memref<72x384xf32, #tpu.memory_space<vmem>>, %arg8: memref<2x!tpu.dma_semaphore, #tpu.memory_space<semaphore_mem>>) attributes {dimension_semantics = [#tpu.dimension_semantics<parallel>, #tpu.dimension_semantics<arbitrary>], iteration_bounds = array<i64: 2, 1>, scalar_prefetch = 0 : i64, scratch_operands = 3 : i64, tpu.core_type = #tpu.core_type<tc>, window_params = [{pipeline_mode = #tpu.pipeline_mode<synchronous>, transform_indices = @transform_0, window_bounds = array<i64: 8, 72>}, {pipeline_mode = #tpu.pipeline_mode<synchronous>, transform_indices = @transform_1, window_bounds = array<i64: 8, 1>}, {}, {transform_indices = @transform_3, window_bounds = array<i64: 1, 8, 384>}]} {
    %c0_i32 = arith.constant 0 : i32
    %0 = arith.cmpi eq, %arg1, %c0_i32 : i32
    %1 = arith.extui %0 : i1 to i32
    %c0_i32_0 = arith.constant 0 : i32
    %2 = arith.cmpi ne, %1, %c0_i32_0 : i32
    scf.if %2 {
      %c0_i32_33 = arith.constant 0 : i32
      %60 = tpu.assume_multiple %c0_i32_33, 128 : i32
      %c0_i32_34 = arith.constant 0 : i32
      %c0_i32_35 = arith.constant 0 : i32
      %c0_i32_36 = arith.constant 0 : i32
      %61 = tpu.memref_slice %arg4[%arg0, %c0_i32_36, %60] : memref<2x8x512xf32, #tpu.memory_space<any>> -> memref<1x8x512xf32, #tpu.memory_space<any>>
      %62 = tpu.memref_squeeze %61 : memref<1x8x512xf32, #tpu.memory_space<any>> -> memref<8x512xf32, #tpu.memory_space<any>>
      %c0_i32_37 = arith.constant 0 : i32
      %c0_i32_38 = arith.constant 0 : i32
      %63 = tpu.memref_slice %arg6[%c0_i32_34, %c0_i32_37, %c0_i32_38] : memref<2x8x512xf32, #tpu.memory_space<vmem>> -> memref<1x8x512xf32, #tpu.memory_space<vmem>>
      %64 = tpu.memref_squeeze %63 : memref<1x8x512xf32, #tpu.memory_space<vmem>> -> memref<8x512xf32, #tpu.memory_space<vmem>>
      %65 = tpu.memref_slice %arg8[%c0_i32_35] : memref<2x!tpu.dma_semaphore, #tpu.memory_space<semaphore_mem>> -> memref<1x!tpu.dma_semaphore, #tpu.memory_space<semaphore_mem>>
      %66 = tpu.memref_squeeze %65 : memref<1x!tpu.dma_semaphore, #tpu.memory_space<semaphore_mem>> -> memref<!tpu.dma_semaphore, #tpu.memory_space<semaphore_mem>>
      tpu.enqueue_dma source(%62 : memref<8x512xf32, #tpu.memory_space<any>>) target(%64 : memref<8x512xf32, #tpu.memory_space<vmem>>) target_semaphore(%66 : memref<!tpu.dma_semaphore, #tpu.memory_space<semaphore_mem>>)
    } else {
    }
    %c2_i32 = arith.constant 2 : i32
    %c0_i32_1 = arith.constant 0 : i32
    %3 = arith.cmpi eq, %c2_i32, %c0_i32_1 : i32
    %c1_i32 = arith.constant 1 : i32
    %4 = arith.select %3, %c1_i32, %c2_i32 : i32
    %5 = arith.remsi %arg1, %4 : i32
    %c0_i32_2 = arith.constant 0 : i32
    %6 = arith.cmpi ne, %5, %c0_i32_2 : i32
    %c0_i32_3 = arith.constant 0 : i32
    %7 = arith.cmpi slt, %5, %c0_i32_3 : i32
    %c0_i32_4 = arith.constant 0 : i32
    %8 = arith.cmpi slt, %4, %c0_i32_4 : i32
    %9 = arith.xori %7, %8 : i1
    %10 = arith.andi %9, %6 : i1
    %11 = arith.addi %5, %4 : i32
    %12 = arith.select %10, %11, %5 : i32
    %c384_i32 = arith.constant 384 : i32
    %13 = arith.muli %arg1, %c384_i32 : i32
    %14 = tpu.assume_multiple %13, 128 : i32
    %c0_i32_5 = arith.constant 0 : i32
    %15 = tpu.memref_slice %arg4[%arg0, %c0_i32_5, %14] : memref<2x8x512xf32, #tpu.memory_space<any>> -> memref<1x8x512xf32, #tpu.memory_space<any>>
    %16 = tpu.memref_squeeze %15 : memref<1x8x512xf32, #tpu.memory_space<any>> -> memref<8x512xf32, #tpu.memory_space<any>>
    %c0_i32_6 = arith.constant 0 : i32
    %c0_i32_7 = arith.constant 0 : i32
    %17 = tpu.memref_slice %arg6[%12, %c0_i32_6, %c0_i32_7] : memref<2x8x512xf32, #tpu.memory_space<vmem>> -> memref<1x8x512xf32, #tpu.memory_space<vmem>>
    %18 = tpu.memref_squeeze %17 : memref<1x8x512xf32, #tpu.memory_space<vmem>> -> memref<8x512xf32, #tpu.memory_space<vmem>>
    %19 = tpu.memref_slice %arg8[%12] : memref<2x!tpu.dma_semaphore, #tpu.memory_space<semaphore_mem>> -> memref<1x!tpu.dma_semaphore, #tpu.memory_space<semaphore_mem>>
    %20 = tpu.memref_squeeze %19 : memref<1x!tpu.dma_semaphore, #tpu.memory_space<semaphore_mem>> -> memref<!tpu.dma_semaphore, #tpu.memory_space<semaphore_mem>>
    tpu.wait_dma2 semaphore(%20 : memref<!tpu.dma_semaphore, #tpu.memory_space<semaphore_mem>>) src(%16 : memref<8x512xf32, #tpu.memory_space<any>>) dst(%18 : memref<8x512xf32, #tpu.memory_space<vmem>>)
    %c1_i32_8 = arith.constant 1 : i32
    %21 = arith.addi %arg1, %c1_i32_8 : i32
    %c1_i32_9 = arith.constant 1 : i32
    %22 = arith.cmpi slt, %21, %c1_i32_9 : i32
    %23 = arith.extui %22 : i1 to i32
    %c0_i32_10 = arith.constant 0 : i32
    %24 = arith.cmpi ne, %23, %c0_i32_10 : i32
    scf.if %24 {
      %c1_i32_33 = arith.constant 1 : i32
      %60 = arith.addi %arg1, %c1_i32_33 : i32
      %c1_i32_34 = arith.constant 1 : i32
      %61 = arith.subi %c1_i32_34, %12 : i32
      %c384_i32_35 = arith.constant 384 : i32
      %62 = arith.muli %60, %c384_i32_35 : i32
      %63 = tpu.assume_multiple %62, 128 : i32
      %c0_i32_36 = arith.constant 0 : i32
      %64 = tpu.memref_slice %arg4[%arg0, %c0_i32_36, %63] : memref<2x8x512xf32, #tpu.memory_space<any>> -> memref<1x8x512xf32, #tpu.memory_space<any>>
      %65 = tpu.memref_squeeze %64 : memref<1x8x512xf32, #tpu.memory_space<any>> -> memref<8x512xf32, #tpu.memory_space<any>>
      %c0_i32_37 = arith.constant 0 : i32
      %c0_i32_38 = arith.constant 0 : i32
      %66 = tpu.memref_slice %arg6[%61, %c0_i32_37, %c0_i32_38] : memref<2x8x512xf32, #tpu.memory_space<vmem>> -> memref<1x8x512xf32, #tpu.memory_space<vmem>>
      %67 = tpu.memref_squeeze %66 : memref<1x8x512xf32, #tpu.memory_space<vmem>> -> memref<8x512xf32, #tpu.memory_space<vmem>>
      %68 = tpu.memref_slice %arg8[%61] : memref<2x!tpu.dma_semaphore, #tpu.memory_space<semaphore_mem>> -> memref<1x!tpu.dma_semaphore, #tpu.memory_space<semaphore_mem>>
      %69 = tpu.memref_squeeze %68 : memref<1x!tpu.dma_semaphore, #tpu.memory_space<semaphore_mem>> -> memref<!tpu.dma_semaphore, #tpu.memory_space<semaphore_mem>>
      tpu.enqueue_dma source(%65 : memref<8x512xf32, #tpu.memory_space<any>>) target(%67 : memref<8x512xf32, #tpu.memory_space<vmem>>) target_semaphore(%69 : memref<!tpu.dma_semaphore, #tpu.memory_space<semaphore_mem>>)
    } else {
    }
    %25 = arith.index_cast %12 : i32 to index
    %c0 = arith.constant 0 : index
    %c0_11 = arith.constant 0 : index
    %26 = vector.load %arg6[%25, %c0, %c0_11] : memref<2x8x512xf32, #tpu.memory_space<vmem>>, vector<1x8x512xf32>
    %27 = vector.shape_cast %26 : vector<1x8x512xf32> to vector<8x512xf32>
    %28 = vector.extract_strided_slice %27 {offsets = [0, 0], sizes = [8, 384], strides = [1, 1]} : vector<8x512xf32> to vector<8x384xf32>
    %c0_12 = arith.constant 0 : index
    %c0_13 = arith.constant 0 : index
    %29 = vector.load %arg7[%c0_12, %c0_13] : memref<72x384xf32, #tpu.memory_space<vmem>>, vector<8x384xf32>
    tpu.vector_store %arg7[%c0_12, %c0_13], %28 {strides = array<i32>} : memref<72x384xf32, #tpu.memory_space<vmem>>, vector<8x384xf32>,
    %30 = vector.extract_strided_slice %27 {offsets = [0, 2], sizes = [8, 384], strides = [1, 1]} : vector<8x512xf32> to vector<8x384xf32>
    %c8 = arith.constant 8 : index
    %c0_14 = arith.constant 0 : index
    %31 = vector.load %arg7[%c8, %c0_14] : memref<72x384xf32, #tpu.memory_space<vmem>>, vector<8x384xf32>
    tpu.vector_store %arg7[%c8, %c0_14], %30 {strides = array<i32>} : memref<72x384xf32, #tpu.memory_space<vmem>>, vector<8x384xf32>,
    %32 = vector.extract_strided_slice %27 {offsets = [0, 4], sizes = [8, 384], strides = [1, 1]} : vector<8x512xf32> to vector<8x384xf32>
    %c16 = arith.constant 16 : index
    %c0_15 = arith.constant 0 : index
    %33 = vector.load %arg7[%c16, %c0_15] : memref<72x384xf32, #tpu.memory_space<vmem>>, vector<8x384xf32>
    tpu.vector_store %arg7[%c16, %c0_15], %32 {strides = array<i32>} : memref<72x384xf32, #tpu.memory_space<vmem>>, vector<8x384xf32>,
    %34 = vector.extract_strided_slice %27 {offsets = [0, 40], sizes = [8, 384], strides = [1, 1]} : vector<8x512xf32> to vector<8x384xf32>
    %c24 = arith.constant 24 : index
    %c0_16 = arith.constant 0 : index
    %35 = vector.load %arg7[%c24, %c0_16] : memref<72x384xf32, #tpu.memory_space<vmem>>, vector<8x384xf32>
    tpu.vector_store %arg7[%c24, %c0_16], %34 {strides = array<i32>} : memref<72x384xf32, #tpu.memory_space<vmem>>, vector<8x384xf32>,
    %36 = vector.extract_strided_slice %27 {offsets = [0, 42], sizes = [8, 384], strides = [1, 1]} : vector<8x512xf32> to vector<8x384xf32>
    %c32 = arith.constant 32 : index
    %c0_17 = arith.constant 0 : index
    %37 = vector.load %arg7[%c32, %c0_17] : memref<72x384xf32, #tpu.memory_space<vmem>>, vector<8x384xf32>
    tpu.vector_store %arg7[%c32, %c0_17], %36 {strides = array<i32>} : memref<72x384xf32, #tpu.memory_space<vmem>>, vector<8x384xf32>,
    %38 = vector.extract_strided_slice %27 {offsets = [0, 44], sizes = [8, 384], strides = [1, 1]} : vector<8x512xf32> to vector<8x384xf32>
    %c40 = arith.constant 40 : index
    %c0_18 = arith.constant 0 : index
    %39 = vector.load %arg7[%c40, %c0_18] : memref<72x384xf32, #tpu.memory_space<vmem>>, vector<8x384xf32>
    tpu.vector_store %arg7[%c40, %c0_18], %38 {strides = array<i32>} : memref<72x384xf32, #tpu.memory_space<vmem>>, vector<8x384xf32>,
    %40 = vector.extract_strided_slice %27 {offsets = [0, 80], sizes = [8, 384], strides = [1, 1]} : vector<8x512xf32> to vector<8x384xf32>
    %c48 = arith.constant 48 : index
    %c0_19 = arith.constant 0 : index
    %41 = vector.load %arg7[%c48, %c0_19] : memref<72x384xf32, #tpu.memory_space<vmem>>, vector<8x384xf32>
    tpu.vector_store %arg7[%c48, %c0_19], %40 {strides = array<i32>} : memref<72x384xf32, #tpu.memory_space<vmem>>, vector<8x384xf32>,
    %42 = vector.extract_strided_slice %27 {offsets = [0, 82], sizes = [8, 384], strides = [1, 1]} : vector<8x512xf32> to vector<8x384xf32>
    %c56 = arith.constant 56 : index
    %c0_20 = arith.constant 0 : index
    %43 = vector.load %arg7[%c56, %c0_20] : memref<72x384xf32, #tpu.memory_space<vmem>>, vector<8x384xf32>
    tpu.vector_store %arg7[%c56, %c0_20], %42 {strides = array<i32>} : memref<72x384xf32, #tpu.memory_space<vmem>>, vector<8x384xf32>,
    %44 = vector.extract_strided_slice %27 {offsets = [0, 84], sizes = [8, 384], strides = [1, 1]} : vector<8x512xf32> to vector<8x384xf32>
    %c64 = arith.constant 64 : index
    %c0_21 = arith.constant 0 : index
    %45 = vector.load %arg7[%c64, %c0_21] : memref<72x384xf32, #tpu.memory_space<vmem>>, vector<8x384xf32>
    tpu.vector_store %arg7[%c64, %c0_21], %44 {strides = array<i32>} : memref<72x384xf32, #tpu.memory_space<vmem>>, vector<8x384xf32>,
    %c0_22 = arith.constant 0 : index
    %c0_23 = arith.constant 0 : index
    %46 = vector.load %arg2[%c0_22, %c0_23] : memref<8x72xf32, #tpu.memory_space<vmem>>, vector<8x72xf32>
    %c0_24 = arith.constant 0 : index
    %c0_25 = arith.constant 0 : index
    %47 = vector.load %arg7[%c0_24, %c0_25] : memref<72x384xf32, #tpu.memory_space<vmem>>, vector<72x384xf32>
    %cst = arith.constant dense<0.000000e+00> : vector<8x384xf32>
    %48 = tpu.matmul %46, %47, %cst {dimension_numbers = #tpu.dot_dimension_numbers<[1], [0], [0], [1], [0, 0, 1, 1], [], []>} : vector<8x72xf32>, vector<72x384xf32>, vector<8x384xf32> -> vector<8x384xf32>
    %c0_26 = arith.constant 0 : index
    %c0_27 = arith.constant 0 : index
    %49 = vector.load %arg3[%c0_26, %c0_27] : memref<8x1xf32, #tpu.memory_space<vmem>>, vector<8x1xf32>
    %50 = vector.broadcast %49 : vector<8x1xf32> to vector<8x384xf32>
    %51 = arith.addf %48, %50 : vector<8x384xf32>
    %cst_28 = arith.constant 0.000000e+00 : f32
    %52 = vector.broadcast %cst_28 : f32 to vector<8x384xf32>
    %53 = arith.cmpf oge, %51, %52 : vector<8x384xf32>
    %cst_29 = arith.constant 0.00999999977 : f32
    %54 = vector.broadcast %cst_29 : f32 to vector<8x384xf32>
    %55 = arith.mulf %54, %51 : vector<8x384xf32>
    %56 = arith.select %53, %51, %55 : vector<8x384xi1>, vector<8x384xf32>
    %c0_30 = arith.constant 0 : index
    %c0_31 = arith.constant 0 : index
    %c0_32 = arith.constant 0 : index
    %57 = vector.load %arg5[%c0_30, %c0_31, %c0_32] : memref<1x8x384xf32, #tpu.memory_space<vmem>>, vector<1x8x384xf32>
    %58 = vector.shape_cast %57 : vector<1x8x384xf32> to vector<8x384xf32>
    %59 = vector.shape_cast %56 : vector<8x384xf32> to vector<1x8x384xf32>
    tpu.vector_store %arg5[%c0_30, %c0_31, %c0_32], %59 {strides = array<i32>} : memref<1x8x384xf32, #tpu.memory_space<vmem>>, vector<1x8x384xf32>,
    return
  }
  func.func @transform_0(%arg0: i32, %arg1: i32) -> (i32, i32) {
    %c0_i32 = arith.constant 0 : i32
    %c0_i32_0 = arith.constant 0 : i32
    %c0_i32_1 = arith.constant 0 : i32
    return %c0_i32, %c0_i32_0 : i32, i32
  }
  func.func @transform_1(%arg0: i32, %arg1: i32) -> (i32, i32) {
    %c0_i32 = arith.constant 0 : i32
    %c0_i32_0 = arith.constant 0 : i32
    %c0_i32_1 = arith.constant 0 : i32
    return %c0_i32, %c0_i32_0 : i32, i32
  }
  func.func @transform_3(%arg0: i32, %arg1: i32) -> (i32, i32, i32) {
    %c0_i32 = arith.constant 0 : i32
    %c0_i32_0 = arith.constant 0 : i32
    return %arg0, %c0_i32, %arg1 : i32, i32, i32
  }
}

</mosaic_0001>

<llo_original>
// kernel: tpu_custom_call.1
$region0: #{tpu_custom_call.1}
  #allocation0 [shape = 'u32[]', space=smem, size = 0x4, offset = 0x4, fixed_abs, tag = 'smem constant byte address 0x4 - core index']
  #allocation1 [shape = 'u32[144,128]{1,0:T(1,128)}', space=vmem, size = 0x12000, scoped, tag = 'internal scratch']
  #allocation2 [shape = 'f32[2,8,512]{2,1,0:T(8,128)}', space=vmem, size = 0x8000, scoped, tag = 'scratch operand']
  #allocation3 [shape = 'f32[72,384]{1,0:T(8,128)}', space=vmem, size = 0x1b000, scoped, tag = 'scratch operand']
  #allocation4 [shape = 's32[2]{0}', space=sflag, size = 0x8, scoped, tag = 'scratch operand']
  #allocation7 [shape = 's32[]', space=sflag, size = 0x4, offset = 0, fixed_abs, tag = 'sflag constant byte address 0x0 - dummy sync flag']
  #allocation8 [shape = 's32[]', space=sflag, size = 0x4, offset = 0, fixed_abs, tag = 'sflag constant byte address 0x0 - dummy sync flag']
  #allocation9 [shape = 'u32[]', space=smem, size = 0x4, offset = 0x44, fixed_abs, tag = 'smem constant byte address 0x44 - assertion arg 0']
  #allocation10 [shape = 'u32[]', space=smem, size = 0x4, offset = 0x48, fixed_abs, tag = 'smem constant byte address 0x48 - assertion arg 1']
  #allocation11 [shape = 's32[]', space=sflag, size = 0x4, offset = 0, fixed_abs, tag = 'sflag constant byte address 0x0 - dummy sync flag']
  #allocation12 [shape = 's32[]', space=sflag, size = 0x4, offset = 0, fixed_abs, tag = 'sflag constant byte address 0x0 - dummy sync flag']
  %s0 = inlined_call_operand.vmem [shape: f32[8,72], index: 0, kind: input, shape index: {}]
  %s1 = inlined_call_operand.vmem [shape: f32[8,1], index: 1, kind: input, shape index: {}]
  %s2 = inlined_call_operand.hbm [shape: f32[2,8,512], index: 2, kind: input, shape index: {}]
  %s3 = inlined_call_operand.hbm [shape: f32[2,8,384], index: 3, kind: output, shape index: {}]
  %s4 = sld [smem:[#allocation0]]
  $region57: #{tpu_custom_call.1} parent=0
    _
  %s6 = ssub.s32 1, %s4
  %s7 = scalar_select 0, %s6, %s4
  $region1: #{tpu_custom_call.1} parent=0
    #allocation5 [shape = 'u8[24576]{0}', space=vmem, size = 0x6000, scoped, tag = 'output window, operand 0']
    #allocation6 [shape = 's32[2]{0}', space=sflag, size = 0x8, scoped, tag = 'scoped memory for tpu_custom_call.1']
    %8 = vsyncpa [#allocation6], 0
    %s9 = scalar_lea.sflag [#allocation6], 1
    %10 = vsyncpa %s9, 0
    loop: start=0, step=1, limit=4
    $region2: #{tpu_custom_call.1} parent=1 // loop_pre_header
      _
    $region3: #{tpu_custom_call.1} parent=1 // loop_header
      %s12 = sphi 0, %s16
      %p13 = scmp.ge.s32.totalorder %s12, 4
      %s19 = sphi 0, %s31
      %s20 = sphi 0, %s27
      %s21 = sphi 0, %s19
      %s22 = sphi 0, %s20
      %s23 = sphi 0, %s21
      %s24 = sphi 0, %s22
      %s32 = sphi 0, %s32
      %s34 = sphi 0, %s32
      %s35 = sphi 0, %s34
      %s49 = sphi 0, %s35
      %s53 = sphi 0, %s53
      %s55 = sphi 0, %s53
      %s56 = sphi 0, %s55
      %s70 = sphi 0, %s56
      %s78 = sphi 0, %s80
      %s81 = sphi 0, %s78
      %s82 = sphi 0, %s81
      %s98 = sphi 0, %s82
    $region4: #{tpu_custom_call.1} parent=1 // loop_header_branch
      %15 = sbr.rel (%p13) target = $region8
    $region5: #{tpu_custom_call.1} parent=1 // loop_body
      %s17 = ssub.s32 %s12, 1
      %s18 = ssub.s32 %s12, 2
      %s25 = sadd.s32 1, %s20
      %p26 = scmp.ge.s32.totalorder %s25, 1
      %s27 = scalar_select %p26, 0, %s25
      %s28 = sadd.s32 1, %s19
      %s29 = scalar_select %p26, %s28, %s19
      %p30 = scmp.ge.s32.totalorder %s29, 2
      %s31 = scalar_select %p30, 0, %s29
      %s33 = sadd.s32 %s32, 1
      %p36 = scmp.eq.s32.totalorder %s12, 1
      %p37 = scmp.ne.s32.totalorder %s32, %s34
      %p38 = scmp.eq.s32.totalorder %s12, 0
      %p39 = por %p37, %p38
      %p40 = scmp.ne.s32.totalorder %s32, %s34
      %p41 = scmp.eq.s32.totalorder %s17, 1
      %p42 = por %p40, %p41
      %p43 = scmp.ne.s32.totalorder %s34, %s35
      %p44 = scmp.eq.s32.totalorder %s17, 0
      %p45 = por %p43, %p44
      %p46 = scmp.ne.s32.totalorder %s34, %s35
      %p47 = scmp.eq.s32.totalorder %s18, 1
      %p48 = por %p46, %p47
      %p50 = scmp.ne.s32.totalorder %s35, %s49
      %p51 = scmp.eq.s32.totalorder %s18, 0
      %p52 = por %p50, %p51
      %s54 = sadd.s32 %s53, 1
      %p57 = scmp.eq.s32.totalorder %s12, 1
      %p58 = scmp.ne.s32.totalorder %s53, %s55
      %p59 = scmp.eq.s32.totalorder %s12, 0
      %p60 = por %p58, %p59
      %p61 = scmp.ne.s32.totalorder %s53, %s55
      %p62 = scmp.eq.s32.totalorder %s17, 1
      %p63 = por %p61, %p62
      %p64 = scmp.ne.s32.totalorder %s55, %s56
      %p65 = scmp.eq.s32.totalorder %s17, 0
      %p66 = por %p64, %p65
      %p67 = scmp.ne.s32.totalorder %s55, %s56
      %p68 = scmp.eq.s32.totalorder %s18, 1
      %p69 = por %p67, %p68
      %p71 = scmp.ne.s32.totalorder %s56, %s70
      %p72 = scmp.eq.s32.totalorder %s18, 0
      %p73 = por %p71, %p72
      %s74 = ssub.s32 %s19, %s31
      %s75 = ssub.s32 %s20, %s27
      %s76 = sor.u32 %s74, %s75
      %p77 = scmp.eq.s32.totalorder %s76, 0
      %s79 = sadd.s32 %s78, 1
      %s80 = scalar_select %p77, %s78, %s79
      %p83 = pneg %p77
      %p84 = scmp.eq.s32.totalorder %s12, 1
      %p85 = por %p83, %p84
      %p86 = scmp.ne.s32.totalorder %s78, %s81
      %p87 = scmp.eq.s32.totalorder %s12, 0
      %p88 = por %p86, %p87
      %p89 = scmp.ne.s32.totalorder %s78, %s81
      %p90 = scmp.eq.s32.totalorder %s17, 1
      %p91 = por %p89, %p90
      %p92 = scmp.ne.s32.totalorder %s81, %s82
      %p93 = scmp.eq.s32.totalorder %s17, 0
      %p94 = por %p92, %p93
      %p95 = scmp.ne.s32.totalorder %s81, %s82
      %p96 = scmp.eq.s32.totalorder %s18, 1
      %p97 = por %p95, %p96
      %p99 = scmp.ne.s32.totalorder %s82, %s98
      %p100 = scmp.eq.s32.totalorder %s18, 0
      %p101 = por %p99, %p100
      %p102 = scmp.le.s32.totalorder 1, %s12
      %p103 = scmp.lt.s32.totalorder %s12, 3
      %p104 = pnand %p102, %p103
      %p105 = pneg %p104
      // Predicated region
      $region9: #{tpu_custom_call.1} parent=5 // pred_check
        _
      $region10: #{tpu_custom_call.1} parent=5 // pred_check_branch
        %107 = sbr.rel (%p104) target = $region12
      $region11: #{tpu_custom_call.1} parent=5 // pred_region
        %s108 = ssub.s32 %s12, 1
        // Predicated region
        $region13: #{tpu_custom_call.1} parent=11 // pred_check
          %p109 = pneg %p45
        $region14: #{tpu_custom_call.1} parent=11 // pred_check_branch
          %111 = sbr.rel (%p109) target = $region16
        $region15: #{tpu_custom_call.1} parent=11 // pred_region
          _
        $region16: #{tpu_custom_call.1} parent=11 // pred_fallthru
          _
        // Predicated region
        $region17: #{tpu_custom_call.1} parent=11 // pred_check
          %p112 = pneg %p66
        $region18: #{tpu_custom_call.1} parent=11 // pred_check_branch
          %114 = sbr.rel (%p112) target = $region20
        $region19: #{tpu_custom_call.1} parent=11 // pred_region
          _
        $region20: #{tpu_custom_call.1} parent=11 // pred_fallthru
          _
      $region12: #{tpu_custom_call.1} parent=5 // pred_fallthru
        _
      %p115 = scmp.lt.s32.totalorder %s12, 2
      // Predicated region
      $region21: #{tpu_custom_call.1} parent=5 // pred_check
        %p116 = pneg %p115
      $region22: #{tpu_custom_call.1} parent=5 // pred_check_branch
        %118 = sbr.rel (%p116) target = $region24
      $region23: #{tpu_custom_call.1} parent=5 // pred_region
        _
      $region24: #{tpu_custom_call.1} parent=5 // pred_fallthru
        _
      %p119 = scmp.le.s32.totalorder 1, %s12
      %p120 = scmp.lt.s32.totalorder %s12, 3
      %p121 = pnand %p119, %p120
      %p122 = pneg %p121
      // Predicated region
      $region25: #{tpu_custom_call.1} parent=5 // pred_check
        _
      $region26: #{tpu_custom_call.1} parent=5 // pred_check_branch
        %124 = sbr.rel (%p121) target = $region28
      $region27: #{tpu_custom_call.1} parent=5 // pred_region
        %s125 = ssub.s32 %s12, 1
        %p126 = pneg %p45
        %p127 = pneg %p42
        %p128 = pneg %p66
        %p129 = pneg %p63
        %p130 = pneg %p94
        %p131 = pneg %p91
        %s132 = sand.u32 %s81, 1
        %s133 = scalar_lea.sflag [#allocation6], %s132
        %s134 = sand.u32 %s81, 1
        %s135 = smul.addr %s134, 24
        %s136 = scalar_lea.vmem [#allocation5], %s135
        %s137 = smul.u32 3, %s22
        %p138 = scmp.eq.s32.totalorder %s22, 0
        // Predicated region
        $region29: #{tpu_custom_call.1} parent=27 // pred_check
          %p139 = pneg %p138
        $region30: #{tpu_custom_call.1} parent=27 // pred_check_branch
          %141 = sbr.rel (%p139) target = $region32
        $region31: #{tpu_custom_call.1} parent=27 // pred_region
          %s142 = smul.u32 %s21, 4
          %s143 = sadd.s32 0, %s142
          %s144 = smul.addr %s143, 128
          %s145 = scalar_lea.hbm %s2, %s144
          // Predicated region
          $region33: #{tpu_custom_call.1} parent=31 // pred_check
            _
          $region34: #{tpu_custom_call.1} parent=31 // pred_check_branch
            %147 = sbr.rel target = $region36
          $region35: #{tpu_custom_call.1} parent=31 // pred_region
            %148 = sst [smem:[#allocation9]] [#allocation8]
            %149 = sst [smem:[#allocation10]] [#allocation7]
          $region36: #{tpu_custom_call.1} parent=31 // pred_fallthru
            _
          %151 = shalt.err (0)
          %s153 = sshll.u32 [#allocation2], 4
          %s154 = int_to_ptr.vmem [resolvable:$true] %s153
          %156 = dma.hbm_to_vmem [thread:$0]  %s145, 512, %s154, [#allocation4]
        $region32: #{tpu_custom_call.1} parent=27 // pred_fallthru
          _
        %p157 = scmp.lt.s32.totalorder %s22, 0
        %s158 = ssub.s32 0, %s22
        %s159 = scalar_select %p157, %s158, %s22
        %s160 = sand.u32 %s159, 1
        %s161 = ssub.s32 0, %s160
        %s162 = scalar_select %p157, %s161, %s160
        %p163 = scmp.ne.s32.totalorder %s162, 0
        %p164 = scmp.lt.s32.totalorder %s162, 0
        %p165 = pnand %p164, %p163
        %p166 = pneg %p165
        %s167 = sadd.s32 %s162, 2
        %s168 = scalar_select %p166, %s167, %s162
        %s169 = smul.u32 %s22, 384
        %s170 = smul.u32 %s168, 4
        %s171 = smul.addr %s170, 8
        %s172 = scalar_lea.vmem [#allocation2], %s171
        %s173 = scalar_lea.sflag [#allocation4], %s168
        %s174 = smul.u32 8, 1
        %s175 = smul.u32 %s174, 4
        %s176 = sshll.u32 %s175, 4
        %177 = dma.done %s173, %s176
        %s178 = sadd.s32 %s22, 1
        %p179 = scmp.lt.s32.totalorder %s178, 1
        // Predicated region
        $region37: #{tpu_custom_call.1} parent=27 // pred_check
          %p180 = pneg %p179
        $region38: #{tpu_custom_call.1} parent=27 // pred_check_branch
          %182 = sbr.rel (%p180) target = $region40
        $region39: #{tpu_custom_call.1} parent=27 // pred_region
          %s183 = ssub.s32 1, %s168
          %s184 = smul.u32 %s178, 384
          %s185 = sshra.s32 %s184, 7
          %s186 = sand.u32 %s184, 127
          %s187 = smul.u32 %s21, 4
          %s188 = sadd.s32 %s185, %s187
          %s189 = smul.addr %s188, 128
          %s190 = scalar_lea.hbm %s2, %s189
          %s191 = smul.u32 %s183, 4
          %s192 = smul.addr %s191, 8
          %s193 = scalar_lea.vmem [#allocation2], %s192
          %s194 = scalar_lea.sflag [#allocation4], %s183
          // Predicated region
          $region41: #{tpu_custom_call.1} parent=39 // pred_check
            _
          $region42: #{tpu_custom_call.1} parent=39 // pred_check_branch
            %196 = sbr.rel target = $region44
          $region43: #{tpu_custom_call.1} parent=39 // pred_region
            %197 = sst [smem:[#allocation9]] [#allocation12]
            %198 = sst [smem:[#allocation10]] [#allocation11]
          $region44: #{tpu_custom_call.1} parent=39 // pred_fallthru
            _
          %200 = shalt.err (0)
          %s202 = sshll.u32 %s193, 4
          %s203 = int_to_ptr.vmem [resolvable:$true] %s202
          %205 = dma.hbm_to_vmem [thread:$0]  %s190, 512, %s203, %s194
        $region40: #{tpu_custom_call.1} parent=27 // pred_fallthru
          _
        %v206 = vld [vmem:[%s172] sm:$0xff]
        %v207 = vld [vmem:[%s172 + $0x8] sm:$0xff]
        %v208 = vld [vmem:[%s172 + $0x10] sm:$0xff]
        %v209 = vld [vmem:[%s172 + $0x18] sm:$0xff]
        %210 = vst [vmem:[#allocation3] sm:$0xff] %v206
        %211 = vst [vmem:[#allocation3 + $0x8] sm:$0xff] %v207
        %212 = vst [vmem:[#allocation3 + $0x10] sm:$0xff] %v208
        %217 = vrot.lane.b32.xlu0 %v206, 126
        %v218 = vpop.permute.xlu0 %217
        %219 = vrot.lane.b32.xlu0 %v207, 126
        %v220 = vpop.permute.xlu0 %219
        %221 = vrot.lane.b32.xlu0 %v208, 126
        %v222 = vpop.permute.xlu0 %221
        %223 = vrot.lane.b32.xlu0 %v209, 126
        %v224 = vpop.permute.xlu0 %223
        %vm225 = vcmask 1031168
        %v226 = vsel %vm225, %v218, %v220
        %v227 = vsel %vm225, %v220, %v222
        %v228 = vsel %vm225, %v222, %v224
        %232 = vst [vmem:[#allocation3 + $0x18] sm:$0xff] %v226
        %233 = vst [vmem:[#allocation3 + $0x20] sm:$0xff] %v227
        %234 = vst [vmem:[#allocation3 + $0x28] sm:$0xff] %v228
        %235 = vrot.lane.b32.xlu0 %v206, 124
        %v236 = vpop.permute.xlu0 %235
        %237 = vrot.lane.b32.xlu0 %v207, 124
        %v238 = vpop.permute.xlu0 %237
        %239 = vrot.lane.b32.xlu0 %v208, 124
        %v240 = vpop.permute.xlu0 %239
        %241 = vrot.lane.b32.xlu0 %v209, 124
        %v242 = vpop.permute.xlu0 %241
        %vm243 = vcmask 1014784
        %v244 = vsel %vm243, %v236, %v238
        %v245 = vsel %vm243, %v238, %v240
        %v246 = vsel %vm243, %v240, %v242
        %250 = vst [vmem:[#allocation3 + $0x30] sm:$0xff] %v244
        %251 = vst [vmem:[#allocation3 + $0x38] sm:$0xff] %v245
        %252 = vst [vmem:[#allocation3 + $0x40] sm:$0xff] %v246
        %253 = vrot.lane.b32.xlu0 %v206, 88
        %v254 = vpop.permute.xlu0 %253
        %255 = vrot.lane.b32.xlu0 %v207, 88
        %v256 = vpop.permute.xlu0 %255
        %257 = vrot.lane.b32.xlu0 %v208, 88
        %v258 = vpop.permute.xlu0 %257
        %259 = vrot.lane.b32.xlu0 %v209, 88
        %v260 = vpop.permute.xlu0 %259
        %vm261 = vcmask 719872
        %v262 = vsel %vm261, %v254, %v256
        %v263 = vsel %vm261, %v256, %v258
        %v264 = vsel %vm261, %v258, %v260
        %268 = vst [vmem:[#allocation3 + $0x48] sm:$0xff] %v262
        %269 = vst [vmem:[#allocation3 + $0x50] sm:$0xff] %v263
        %270 = vst [vmem:[#allocation3 + $0x58] sm:$0xff] %v264
        %271 = vrot.lane.b32.xlu0 %v206, 86
        %v272 = vpop.permute.xlu0 %271
        %273 = vrot.lane.b32.xlu0 %v207, 86
        %v274 = vpop.permute.xlu0 %273
        %275 = vrot.lane.b32.xlu0 %v208, 86
        %v276 = vpop.permute.xlu0 %275
        %277 = vrot.lane.b32.xlu0 %v209, 86
        %v278 = vpop.permute.xlu0 %277
        %vm279 = vcmask 703488
        %v280 = vsel %vm279, %v272, %v274
        %v281 = vsel %vm279, %v274, %v276
        %v282 = vsel %vm279, %v276, %v278
        %286 = vst [vmem:[#allocation3 + $0x60] sm:$0xff] %v280
        %287 = vst [vmem:[#allocation3 + $0x68] sm:$0xff] %v281
        %288 = vst [vmem:[#allocation3 + $0x70] sm:$0xff] %v282
        %289 = vrot.lane.b32.xlu0 %v206, 84
        %v290 = vpop.permute.xlu0 %289
        %291 = vrot.lane.b32.xlu0 %v207, 84
        %v292 = vpop.permute.xlu0 %291
        %293 = vrot.lane.b32.xlu0 %v208, 84
        %v294 = vpop.permute.xlu0 %293
        %295 = vrot.lane.b32.xlu0 %v209, 84
        %v296 = vpop.permute.xlu0 %295
        %vm297 = vcmask 687104
        %v298 = vsel %vm297, %v290, %v292
        %v299 = vsel %vm297, %v292, %v294
        %v300 = vsel %vm297, %v294, %v296
        %304 = vst [vmem:[#allocation3 + $0x78] sm:$0xff] %v298
        %305 = vst [vmem:[#allocation3 + $0x80] sm:$0xff] %v299
        %306 = vst [vmem:[#allocation3 + $0x88] sm:$0xff] %v300
        %307 = vrot.lane.b32.xlu0 %v206, 48
        %v308 = vpop.permute.xlu0 %307
        %309 = vrot.lane.b32.xlu0 %v207, 48
        %v310 = vpop.permute.xlu0 %309
        %311 = vrot.lane.b32.xlu0 %v208, 48
        %v312 = vpop.permute.xlu0 %311
        %313 = vrot.lane.b32.xlu0 %v209, 48
        %v314 = vpop.permute.xlu0 %313
        %vm315 = vcmask 392192
        %v316 = vsel %vm315, %v308, %v310
        %v317 = vsel %vm315, %v310, %v312
        %v318 = vsel %vm315, %v312, %v314
        %322 = vst [vmem:[#allocation3 + $0x90] sm:$0xff] %v316
        %323 = vst [vmem:[#allocation3 + $0x98] sm:$0xff] %v317
        %324 = vst [vmem:[#allocation3 + $0xa0] sm:$0xff] %v318
        %325 = vrot.lane.b32.xlu0 %v206, 46
        %v326 = vpop.permute.xlu0 %325
        %327 = vrot.lane.b32.xlu0 %v207, 46
        %v328 = vpop.permute.xlu0 %327
        %329 = vrot.lane.b32.xlu0 %v208, 46
        %v330 = vpop.permute.xlu0 %329
        %331 = vrot.lane.b32.xlu0 %v209, 46
        %v332 = vpop.permute.xlu0 %331
        %vm333 = vcmask 375808
        %v334 = vsel %vm333, %v326, %v328
        %v335 = vsel %vm333, %v328, %v330
        %v336 = vsel %vm333, %v330, %v332
        %340 = vst [vmem:[#allocation3 + $0xa8] sm:$0xff] %v334
        %341 = vst [vmem:[#allocation3 + $0xb0] sm:$0xff] %v335
        %342 = vst [vmem:[#allocation3 + $0xb8] sm:$0xff] %v336
        %343 = vrot.lane.b32.xlu0 %v206, 44
        %v344 = vpop.permute.xlu0 %343
        %345 = vrot.lane.b32.xlu0 %v207, 44
        %v346 = vpop.permute.xlu0 %345
        %347 = vrot.lane.b32.xlu0 %v208, 44
        %v348 = vpop.permute.xlu0 %347
        %349 = vrot.lane.b32.xlu0 %v209, 44
        %v350 = vpop.permute.xlu0 %349
        %vm351 = vcmask 359424
        %v352 = vsel %vm351, %v344, %v346
        %v353 = vsel %vm351, %v346, %v348
        %v354 = vsel %vm351, %v348, %v350
        %358 = vst [vmem:[#allocation3 + $0xc0] sm:$0xff] %v352
        %359 = vst [vmem:[#allocation3 + $0xc8] sm:$0xff] %v353
        %360 = vst [vmem:[#allocation3 + $0xd0] sm:$0xff] %v354
        %v361 = vld [vmem:[%s0] sm:$0xff]
        %v362 = vld [vmem:[#allocation3] sm:$0xff]
        %v363 = vld [vmem:[#allocation3 + $0x8] sm:$0xff]
        %v364 = vld [vmem:[#allocation3 + $0x10] sm:$0xff]
        %v365 = vld [vmem:[#allocation3 + $0x18] sm:$0xff]
        %v366 = vld [vmem:[#allocation3 + $0x20] sm:$0xff]
        %v367 = vld [vmem:[#allocation3 + $0x28] sm:$0xff]
        %v368 = vld [vmem:[#allocation3 + $0x30] sm:$0xff]
        %v369 = vld [vmem:[#allocation3 + $0x38] sm:$0xff]
        %v370 = vld [vmem:[#allocation3 + $0x40] sm:$0xff]
        %v371 = vld [vmem:[#allocation3 + $0x48] sm:$0xff]
        %v372 = vld [vmem:[#allocation3 + $0x50] sm:$0xff]
        %v373 = vld [vmem:[#allocation3 + $0x58] sm:$0xff]
        %v374 = vld [vmem:[#allocation3 + $0x60] sm:$0xff]
        %v375 = vld [vmem:[#allocation3 + $0x68] sm:$0xff]
        %v376 = vld [vmem:[#allocation3 + $0x70] sm:$0xff]
        %v377 = vld [vmem:[#allocation3 + $0x78] sm:$0xff]
        %v378 = vld [vmem:[#allocation3 + $0x80] sm:$0xff]
        %v379 = vld [vmem:[#allocation3 + $0x88] sm:$0xff]
        %v380 = vld [vmem:[#allocation3 + $0x90] sm:$0xff]
        %v381 = vld [vmem:[#allocation3 + $0x98] sm:$0xff]
        %v382 = vld [vmem:[#allocation3 + $0xa0] sm:$0xff]
        %v383 = vld [vmem:[#allocation3 + $0xa8] sm:$0xff]
        %v384 = vld [vmem:[#allocation3 + $0xb0] sm:$0xff]
        %v385 = vld [vmem:[#allocation3 + $0xb8] sm:$0xff]
        %v386 = vld [vmem:[#allocation3 + $0xc0] sm:$0xff]
        %v387 = vld [vmem:[#allocation3 + $0xc8] sm:$0xff]
        %v388 = vld [vmem:[#allocation3 + $0xd0] sm:$0xff]
        %v389 = vld [vmem:[%s1] sm:$0xff]
        %391 = vset.pattern.permute.xlu0 0
        %392 = vperm.xlu0 %391, %v389
        %v393 = vpop.permute.xlu0 %392
        %vm395 = vcmask 588800
        %v397 = vsel %vm395, %v361, 0
        %399 = vmatprep.subr.mxu0 0.0
        %400 = vmatpush1.msra.mxu0 0.0
        %401 = vmatprep.subr.mxu0 0.0
        %402 = vmatpush1.msra.mxu0 0.0
        %403 = vmatprep.subr.mxu0 0.0
        %404 = vmatpush1.msra.mxu0 0.0
        %405 = vmatprep.subr.mxu0 0.0
        %406 = vmatpush1.msra.mxu0 0.0
        %407 = vmatprep.subr.mxu0 0.0
        %408 = vmatpush1.msra.mxu0 0.0
        %409 = vmatprep.subr.mxu0 0.0
        %410 = vmatpush1.msra.mxu0 0.0
        %411 = vmatprep.subr.mxu0 0.0
        %412 = vmatpush1.msra.mxu0 0.0
        %413 = vmatprep.subr.mxu0 %v387
        %414 = vmatpush1.msra.mxu0 %v386
        %415 = vmatprep.subr.mxu0 %v384
        %416 = vmatpush1.msra.mxu0 %v383
        %417 = vmatprep.subr.mxu0 %v381
        %418 = vmatpush1.msra.mxu0 %v380
        %419 = vmatprep.subr.mxu0 %v378
        %420 = vmatpush1.msra.mxu0 %v377
        %421 = vmatprep.subr.mxu0 %v375
        %422 = vmatpush1.msra.mxu0 %v374
        %423 = vmatprep.subr.mxu0 %v372
        %424 = vmatpush1.msra.mxu0 %v371
        %425 = vmatprep.subr.mxu0 %v369
        %426 = vmatpush1.msra.mxu0 %v368
        %427 = vmatprep.subr.mxu0 %v366
        %428 = vmatpush1.msra.mxu0 %v365
        %429 = vmatprep.subr.mxu0 %v363
        %430 = vmatpush1.msra.mxu0 %v362
        %431 = vmatprep.subr.mxu0 0.0
        %432 = vmatpush2.msra.mxu0 0.0
        %433 = vmatprep.subr.mxu0 0.0
        %434 = vmatpush2.msra.mxu0 0.0
        %435 = vmatprep.subr.mxu0 0.0
        %436 = vmatpush2.msra.mxu0 0.0
        %437 = vmatprep.subr.mxu0 0.0
        %438 = vmatpush2.msra.mxu0 0.0
        %439 = vmatprep.subr.mxu0 0.0
        %440 = vmatpush2.msra.mxu0 0.0
        %441 = vmatprep.subr.mxu0 0.0
        %442 = vmatpush2.msra.mxu0 0.0
        %443 = vmatprep.subr.mxu0 0.0
        %444 = vmatpush2.msra.mxu0 0.0
        %445 = vmatprep.subr.mxu0 0.0
        %446 = vmatpush2.msra.mxu0 0.0
        %447 = vmatprep.subr.mxu0 0.0
        %448 = vmatpush2.msra.mxu0 0.0
        %449 = vmatprep.subr.mxu0 0.0
        %450 = vmatpush2.msra.mxu0 0.0
        %451 = vmatprep.subr.mxu0 0.0
        %452 = vmatpush2.msra.mxu0 0.0
        %453 = vmatprep.subr.mxu0 0.0
        %454 = vmatpush2.msra.mxu0 0.0
        %455 = vmatprep.subr.mxu0 0.0
        %456 = vmatpush2.msra.mxu0 0.0
        %457 = vmatprep.subr.mxu0 0.0
        %458 = vmatpush2.msra.mxu0 0.0
        %459 = vmatprep.subr.mxu0 0.0
        %460 = vmatpush2.msra.mxu0 0.0
        %461 = vmatprep.subr.mxu0 0.0
        %462 = vmatpush2.msra.mxu0 0.0
        %463 = vmatprep.mubr.f32.mxu0 0.0
        %464 = vmatmul.mubr.f32.gmra.mxu0 %v397
        %v465 = vpop.f32.mrf.mxu0
        %v466 = vadd.f32 %v393, %v465
        %v467 = vpop.f32.mrf.mxu0
        %v468 = vadd.f32 %v393, %v467
        %469 = vdwg.mxu0
        %470 = vmatprep.subr.mxu0 0.0
        %471 = vmatpush1.msra.mxu0 0.0
        %472 = vmatprep.subr.mxu0 0.0
        %473 = vmatpush1.msra.mxu0 0.0
        %474 = vmatprep.subr.mxu0 0.0
        %475 = vmatpush1.msra.mxu0 0.0
        %476 = vmatprep.subr.mxu0 0.0
        %477 = vmatpush1.msra.mxu0 0.0
        %478 = vmatprep.subr.mxu0 0.0
        %479 = vmatpush1.msra.mxu0 0.0
        %480 = vmatprep.subr.mxu0 0.0
        %481 = vmatpush1.msra.mxu0 0.0
        %482 = vmatprep.subr.mxu0 0.0
        %483 = vmatpush1.msra.mxu0 0.0
        %484 = vmatprep.subr.mxu0 0.0
        %485 = vmatpush1.msra.mxu0 %v388
        %486 = vmatprep.subr.mxu0 0.0
        %487 = vmatpush1.msra.mxu0 %v385
        %488 = vmatprep.subr.mxu0 0.0
        %489 = vmatpush1.msra.mxu0 %v382
        %490 = vmatprep.subr.mxu0 0.0
        %491 = vmatpush1.msra.mxu0 %v379
        %492 = vmatprep.subr.mxu0 0.0
        %493 = vmatpush1.msra.mxu0 %v376
        %494 = vmatprep.subr.mxu0 0.0
        %495 = vmatpush1.msra.mxu0 %v373
        %496 = vmatprep.subr.mxu0 0.0
        %497 = vmatpush1.msra.mxu0 %v370
        %498 = vmatprep.subr.mxu0 0.0
        %499 = vmatpush1.msra.mxu0 %v367
        %500 = vmatprep.subr.mxu0 0.0
        %501 = vmatpush1.msra.mxu0 %v364
        %502 = vmatprep.subr.mxu0 0.0
        %503 = vmatpush2.msra.mxu0 0.0
        %504 = vmatprep.subr.mxu0 0.0
        %505 = vmatpush2.msra.mxu0 0.0
        %506 = vmatprep.subr.mxu0 0.0
        %507 = vmatpush2.msra.mxu0 0.0
        %508 = vmatprep.subr.mxu0 0.0
        %509 = vmatpush2.msra.mxu0 0.0
        %510 = vmatprep.subr.mxu0 0.0
        %511 = vmatpush2.msra.mxu0 0.0
        %512 = vmatprep.subr.mxu0 0.0
        %513 = vmatpush2.msra.mxu0 0.0
        %514 = vmatprep.subr.mxu0 0.0
        %515 = vmatpush2.msra.mxu0 0.0
        %516 = vmatprep.subr.mxu0 0.0
        %517 = vmatpush2.msra.mxu0 0.0
        %518 = vmatprep.subr.mxu0 0.0
        %519 = vmatpush2.msra.mxu0 0.0
        %520 = vmatprep.subr.mxu0 0.0
        %521 = vmatpush2.msra.mxu0 0.0
        %522 = vmatprep.subr.mxu0 0.0
        %523 = vmatpush2.msra.mxu0 0.0
        %524 = vmatprep.subr.mxu0 0.0
        %525 = vmatpush2.msra.mxu0 0.0
        %526 = vmatprep.subr.mxu0 0.0
        %527 = vmatpush2.msra.mxu0 0.0
        %528 = vmatprep.subr.mxu0 0.0
        %529 = vmatpush2.msra.mxu0 0.0
        %530 = vmatprep.subr.mxu0 0.0
        %531 = vmatpush2.msra.mxu0 0.0
        %532 = vmatprep.subr.mxu0 0.0
        %533 = vmatpush2.msra.mxu0 0.0
        %534 = vmatprep.mubr.f32.mxu0 0.0
        %535 = vmatmul.mubr.f32.gmra.mxu0 %v397
        %v536 = vpop.f32.mrf.mxu0
        %v537 = vadd.f32 %v393, %v536
        %v538 = vpop.f32.mrf.mxu0
        %539 = vdwg.mxu0
        %vm540 = vcmp.ge.f32.partialorder %v466, 0.0
        %vm541 = vcmp.ge.f32.partialorder %v468, 0.0
        %vm542 = vcmp.ge.f32.partialorder %v537, 0.0
        %v543 = vmul.f32 %v466, 0.01
        %v544 = vmul.f32 %v468, 0.01
        %v545 = vmul.f32 %v537, 0.01
        %v546 = vsel %vm540, %v466, %v543
        %v547 = vsel %vm541, %v468, %v544
        %v548 = vsel %vm542, %v537, %v545
        %549 = vst [vmem:[%s136] sm:$0xff] %v546
        %550 = vst [vmem:[%s136 + $0x8] sm:$0xff] %v547
        %551 = vst [vmem:[%s136 + $0x10] sm:$0xff] %v548
        %s552 = sand.u32 %s81, 1
        %s553 = scalar_lea.sflag [#allocation6], %s552
        %s554 = sand.u32 %s81, 1
        %s555 = smul.addr %s554, 24
        %s556 = scalar_lea.vmem [#allocation5], %s555
        // Predicated region
        $region45: #{tpu_custom_call.1} parent=27 // pred_check
          %p557 = pneg %p91
        $region46: #{tpu_custom_call.1} parent=27 // pred_check_branch
          %559 = sbr.rel (%p557) target = $region48
        $region47: #{tpu_custom_call.1} parent=27 // pred_region
          %s560 = smul.u32 3, %s22
          %s562 = ssub.s32 384, 384
          %563 = vsyncadd %s553, %s562
          %s564 = smul.addr %s21, 3
          %s565 = sadd.s32 %s560, %s564
          %s566 = smul.addr %s565, 128
          %s567 = scalar_lea.hbm %s3, %s566
          %s569 = sshll.u32 %s556, 4
          %s570 = int_to_ptr.vmem [resolvable:$true] %s569
          %572 = dma.vmem_to_hbm [thread:$0]  %s570, 384, %s567, %s553
        $region48: #{tpu_custom_call.1} parent=27 // pred_fallthru
          _
      $region28: #{tpu_custom_call.1} parent=5 // pred_fallthru
        _
      %p573 = scmp.le.s32.totalorder 2, %s12
      // Predicated region
      $region49: #{tpu_custom_call.1} parent=5 // pred_check
        %p574 = pneg %p573
      $region50: #{tpu_custom_call.1} parent=5 // pred_check_branch
        %576 = sbr.rel (%p574) target = $region52
      $region51: #{tpu_custom_call.1} parent=5 // pred_region
        %s577 = ssub.s32 %s12, 2
        // Predicated region
        $region53: #{tpu_custom_call.1} parent=51 // pred_check
          %p578 = pneg %p97
        $region54: #{tpu_custom_call.1} parent=51 // pred_check_branch
          %580 = sbr.rel (%p578) target = $region56
        $region55: #{tpu_custom_call.1} parent=51 // pred_region
          %s581 = sand.u32 %s82, 1
          %s582 = scalar_lea.sflag [#allocation6], %s581
          %s583 = sand.u32 %s82, 1
          %s584 = smul.addr %s583, 24
          %s585 = scalar_lea.vmem [#allocation5], %s584
          %586 = dma.done %s582, 384
        $region56: #{tpu_custom_call.1} parent=51 // pred_fallthru
          _
      $region52: #{tpu_custom_call.1} parent=5 // pred_fallthru
        _
    $region6: #{tpu_custom_call.1} parent=1 // loop_footer
      %s16 = sadd.s32 1, %s12
    $region7: #{tpu_custom_call.1} parent=1 // loop_footer_branch
      %11 = sbr.rel target = $region3
    $region8: #{tpu_custom_call.1} parent=1 // loop_exit
      _
    %587 = vsyncpa [#allocation6], 1
    %s588 = scalar_lea.sflag [#allocation6], 1
    %589 = vsyncpa %s588, 1
  %590 = vsyncmov [#allocation4]
  %s591 = vpop.sfrf %590
  %p592 = scmp.eq.s32.totalorder %s591, 0
  %p593 = pneg %p592
  %595 = shalt.err (%p593)
  %s596 = scalar_lea.sflag [#allocation4], 1
  %597 = vsyncmov %s596
  %s598 = vpop.sfrf %597
  %p599 = scmp.eq.s32.totalorder %s598, 0
  %p600 = pneg %p599
  %602 = shalt.err (%p600)

</llo_original>
